<compile_context>
chip_gen: v5e
topology: v5e:2x2
jax: 0.10.0
libtpu: 0.0.40
codegen_flags: <defaults>
</compile_context>

<pallas_src>
import numpy as np
import jax
import jax.numpy as jnp
from jax.experimental import pallas as pl
from jax.experimental.pallas import tpu as pltpu


# ----------------------------- parameter setup ------------------------------

def _round_up(x: int, m: int) -> int:
    return (x + m - 1) // m * m


def _hamming_window(n_fft: int) -> np.ndarray:
    # torch.hamming_window(n_fft, periodic=False)
    n = np.arange(n_fft, dtype=np.float64)
    return 0.54 - 0.46 * np.cos(2.0 * np.pi * n / (n_fft - 1))


def _windowed_dft_matrix(n_fft: int, nf_pad: int) -> np.ndarray:
    # Fused real-DFT matrix with the Hamming window folded in:
    #   M[:, :nf]              =  w * cos(2*pi*n*k/N)
    #   M[:, nf_pad:nf_pad+nf] = -w * sin(2*pi*n*k/N)
    # columns nf..nf_pad-1 (and the mirrored sin half) are zero padding so the
    # cos/sin halves start on 128-lane boundaries for any n_fft.
    # The Nyquist bin (k = n_fft//2) is intentionally omitted (mel weight == 0).
    nf = n_fft // 2
    w = _hamming_window(n_fft)[:, None]                         # (n_fft, 1)
    n = np.arange(n_fft, dtype=np.float64)[:, None]
    k = np.arange(nf, dtype=np.float64)[None, :]
    ang = 2.0 * np.pi * n * k / n_fft
    m = np.zeros((n_fft, 2 * nf_pad), dtype=np.float64)
    m[:, :nf] = w * np.cos(ang)
    m[:, nf_pad:nf_pad + nf] = w * (-np.sin(ang))
    return m.astype(np.float32)                                 # (n_fft, 2*nf_pad)


def _mel_fbanks(n_freq: int, f_min: float, f_max: float, n_mels: int,
                sample_rate: int) -> np.ndarray:
    # torchaudio.functional.melscale_fbanks, norm=None, mel_scale='htk'
    all_freqs = np.linspace(0.0, sample_rate / 2.0, n_freq)

    def hz_to_mel(f):
        return 2595.0 * np.log10(1.0 + f / 700.0)

    def mel_to_hz(m):
        return 700.0 * (10.0 ** (m / 2595.0) - 1.0)

    m_pts = np.linspace(hz_to_mel(f_min), hz_to_mel(f_max), n_mels + 2)
    f_pts = mel_to_hz(m_pts)
    f_diff = f_pts[1:] - f_pts[:-1]                      # (n_mels + 1,)
    slopes = f_pts[None, :] - all_freqs[:, None]         # (n_freq, n_mels + 2)
    down_slopes = -slopes[:, :-2] / f_diff[:-1]
    up_slopes = slopes[:, 2:] / f_diff[1:]
    fb = np.maximum(0.0, np.minimum(down_slopes, up_slopes))
    return fb.astype(np.float32)                          # (n_freq, n_mels)


# ------------------------------- Pallas kernel -------------------------------

def _preproc_kernel(frames_ref, dft_ref, fb_ref, x_ref, logx_ref):
    # frames_ref: (TR, n_fft)           row tile of frame samples (streamed)
    # dft_ref   : (n_fft, 2*nf_pad)     window-folded [cos | sin] DFT (resident)
    # fb_ref    : (nf_pad, n_mels_pad)  zero-padded HTK mel filterbank (resident)
    # x_ref / logx_ref : (TR, n_mels_pad)
    nf_pad = fb_ref.shape[0]
    spec = jnp.dot(frames_ref[...], dft_ref[...],
                   preferred_element_type=jnp.float32)        # MXU, (TR, 2*nf_pad)
    sq = spec * spec                                          # VPU
    mag = jnp.sqrt(sq[:, :nf_pad] + sq[:, nf_pad:])           # |X|, power=1
    mel = jnp.dot(mag, fb_ref[...],
                  preferred_element_type=jnp.float32)         # MXU, (TR, n_mels_pad)
    x_ref[...] = mel
    # AmplitudeToDB(stype='amplitude') -> multiplier 20, amin=1e-5, ref=1.0
    db = 20.0 * jnp.log10(jnp.maximum(mel, 1e-5))             # EUP log
    logx_ref[...] = jnp.clip(db, -50.0, 80.0)


# --------------------------------- wrapper -----------------------------------

def _frame_signal(wav_p, n_frames: int, n_fft: int, hop_length: int):
    """Build overlapping frames (B, n_frames, n_fft) of the padded waveform."""
    B = wav_p.shape[0]
    if n_fft % hop_length == 0:
        # Gather-free path: r shifted contiguous strided slices + concat.
        r = n_fft // hop_length
        total = (n_frames - 1 + r) * hop_length
        if wav_p.shape[1] < total:
            wav_p = jnp.pad(wav_p, ((0, 0), (0, total - wav_p.shape[1])))
        chunks = wav_p[:, :total].reshape(B, n_frames - 1 + r, hop_length)
        return jnp.concatenate(
            [chunks[:, j:j + n_frames, :] for j in range(r)], axis=2)
    # General fallback: gather.
    idx = (jnp.arange(n_frames)[:, None] * hop_length
           + jnp.arange(n_fft)[None, :])                 # (F, n_fft)
    return wav_p[:, idx]


def preprocessor_forward(wav, y=None, *, sample_rate, n_fft, hop_length, n_mels):
    wav = wav.astype(jnp.float32)
    B, T = wav.shape
    pad = n_fft // 2
    # center=True STFT: reflect-pad n_fft//2 on each side, then frame with hop.
    wav_p = jnp.pad(wav, ((0, 0), (pad, pad)), mode="reflect")
    n_frames = 1 + T // hop_length
    frames = _frame_signal(wav_p, n_frames, n_fft, hop_length)   # (B, F, n_fft)
    rows = B * n_frames
    frames2d = frames.reshape(rows, n_fft)

    nf = n_fft // 2                                       # freq bins kept (no Nyquist)
    nf_pad = _round_up(nf, 128)                           # lane-aligned cos/sin halves
    n_mels_pad = _round_up(max(n_mels, 128), 128)         # dense 128-lane stores

    # Row tile: big enough to amortize per-step overhead, 128-aligned.
    TR = min(1024, _round_up(rows, 128))
    rows_p = _round_up(rows, TR)
    if rows_p != rows:
        frames2d = jnp.pad(frames2d, ((0, rows_p - rows), (0, 0)))

    dft_m = jnp.asarray(_windowed_dft_matrix(n_fft, nf_pad))   # (n_fft, 2*nf_pad)

    # Mel fbank on the full onesided grid (n_fft//2 + 1 bins), then drop the
    # Nyquist row (its triangle weight is 0) and zero-pad freq & mel axes.
    fb_full = _mel_fbanks(n_fft // 2 + 1, 0.0, sample_rate / 2.0,
                          n_mels, sample_rate)            # (n_fft//2+1, n_mels)
    fb_pad = np.zeros((nf_pad, n_mels_pad), dtype=np.float32)
    fb_pad[:nf, :n_mels] = fb_full[:nf, :]
    fb = jnp.asarray(fb_pad)

    grid = (rows_p // TR,)
    x2d, logx2d = pl.pallas_call(
        _preproc_kernel,
        out_shape=(jax.ShapeDtypeStruct((rows_p, n_mels_pad), jnp.float32),
                   jax.ShapeDtypeStruct((rows_p, n_mels_pad), jnp.float32)),
        grid=grid,
        in_specs=[
            pl.BlockSpec((TR, n_fft), lambda i: (i, 0)),            # streamed rows
            pl.BlockSpec((n_fft, 2 * nf_pad), lambda i: (0, 0)),    # resident constants
            pl.BlockSpec((nf_pad, n_mels_pad), lambda i: (0, 0)),
        ],
        out_specs=(pl.BlockSpec((TR, n_mels_pad), lambda i: (i, 0)),
                   pl.BlockSpec((TR, n_mels_pad), lambda i: (i, 0))),
        compiler_params=pltpu.CompilerParams(
            dimension_semantics=("parallel",),            # independent row tiles
            vmem_limit_bytes=64 * 1024 * 1024),
    )(frames2d, dft_m, fb)

    # Drop row / mel padding, back to torch layout: (B, n_mels, n_frames)
    x = x2d[:rows, :n_mels].reshape(B, n_frames, n_mels).transpose(0, 2, 1)
    logx = logx2d[:rows, :n_mels].reshape(B, n_frames, n_mels).transpose(0, 2, 1)
    # wav/mel/logmel transform lists are empty -> identity (TupleSequential()).
    return {"wav": wav, "x": x, "logx": logx}, y


# ----------------------------------- main ------------------------------------

if __name__ == "__main__":
    sample_rate = 16000
    n_fft = 256
    hop_length = 64
    n_mels = 16
    B, T = 2, 1024

    key = jax.random.PRNGKey(0)
    wav = jax.random.normal(key, (B, T), dtype=jnp.float32) * 0.1

    out, y = preprocessor_forward(
        wav, None,
        sample_rate=sample_rate, n_fft=n_fft,
        hop_length=hop_length, n_mels=n_mels)
    jax.block_until_ready(out)

    n_frames = 1 + T // hop_length
    assert out["wav"].shape == (B, T)
    assert out["x"].shape == (B, n_mels, n_frames)
    assert out["logx"].shape == (B, n_mels, n_frames)
    assert bool(jnp.all(jnp.isfinite(out["x"])))
    assert bool(jnp.all(out["x"] >= 0.0))
    assert bool(jnp.all(out["logx"] >= -50.0)) and bool(jnp.all(out["logx"] <= 80.0))
    assert y is None
    print("KERNEL_OK")
</pallas_src>

<mosaic_0001>
module attributes {stable_mosaic.version = 11 : i64} {
  func.func @_preproc_kernel(%arg0: i32, %arg1: memref<128x256xf32, #tpu.memory_space<vmem>>, %arg2: memref<256x256xf32, #tpu.memory_space<vmem>>, %arg3: memref<128x128xf32, #tpu.memory_space<vmem>>, %arg4: memref<128x128xf32, #tpu.memory_space<vmem>>, %arg5: memref<128x128xf32, #tpu.memory_space<vmem>>) attributes {dimension_semantics = [#tpu.dimension_semantics<parallel>], iteration_bounds = array<i64: 1>, scalar_prefetch = 0 : i64, scratch_operands = 0 : i64, tpu.core_type = #tpu.core_type<tc>, window_params = [{transform_indices = @transform_0, window_bounds = array<i64: 128, 256>}, {pipeline_mode = #tpu.pipeline_mode<synchronous>, transform_indices = @transform_1, window_bounds = array<i64: 256, 256>}, {pipeline_mode = #tpu.pipeline_mode<synchronous>, transform_indices = @transform_2, window_bounds = array<i64: 128, 128>}, {transform_indices = @transform_3, window_bounds = array<i64: 128, 128>}, {transform_indices = @transform_4, window_bounds = array<i64: 128, 128>}]} {
    %c0 = arith.constant 0 : index
    %c0_0 = arith.constant 0 : index
    %0 = vector.load %arg1[%c0, %c0_0] : memref<128x256xf32, #tpu.memory_space<vmem>>, vector<128x256xf32>
    %c0_1 = arith.constant 0 : index
    %c0_2 = arith.constant 0 : index
    %1 = vector.load %arg2[%c0_1, %c0_2] : memref<256x256xf32, #tpu.memory_space<vmem>>, vector<256x256xf32>
    %cst = arith.constant dense<0.000000e+00> : vector<128x256xf32>
    %2 = tpu.matmul %0, %1, %cst {dimension_numbers = #tpu.dot_dimension_numbers<[1], [0], [0], [1], [0, 0, 1, 1], [], []>} : vector<128x256xf32>, vector<256x256xf32>, vector<128x256xf32> -> vector<128x256xf32>
    %3 = arith.mulf %2, %2 : vector<128x256xf32>
    %4 = vector.extract_strided_slice %3 {offsets = [0, 0], sizes = [128, 128], strides = [1, 1]} : vector<128x256xf32> to vector<128x128xf32>
    %5 = vector.extract_strided_slice %3 {offsets = [0, 128], sizes = [128, 128], strides = [1, 1]} : vector<128x256xf32> to vector<128x128xf32>
    %6 = arith.addf %4, %5 : vector<128x128xf32>
    %7 = math.sqrt %6 : vector<128x128xf32>
    %c0_3 = arith.constant 0 : index
    %c0_4 = arith.constant 0 : index
    %8 = vector.load %arg3[%c0_3, %c0_4] : memref<128x128xf32, #tpu.memory_space<vmem>>, vector<128x128xf32>
    %cst_5 = arith.constant dense<0.000000e+00> : vector<128x128xf32>
    %9 = tpu.matmul %7, %8, %cst_5 {dimension_numbers = #tpu.dot_dimension_numbers<[1], [0], [0], [1], [0, 0, 1, 1], [], []>} : vector<128x128xf32>, vector<128x128xf32>, vector<128x128xf32> -> vector<128x128xf32>
    %c0_6 = arith.constant 0 : index
    %c0_7 = arith.constant 0 : index
    %10 = vector.load %arg4[%c0_6, %c0_7] : memref<128x128xf32, #tpu.memory_space<vmem>>, vector<128x128xf32>
    tpu.vector_store %arg4[%c0_6, %c0_7], %9 {strides = array<i32>} : memref<128x128xf32, #tpu.memory_space<vmem>>, vector<128x128xf32>,
    %cst_8 = arith.constant 9.99999974E-6 : f32
    %11 = vector.broadcast %cst_8 : f32 to vector<128x128xf32>
    %12 = arith.maximumf %9, %11 : vector<128x128xf32>
    %13 = math.log %12 : vector<128x128xf32>
    %cst_9 = arith.constant 0.434294492 : f32
    %14 = vector.broadcast %cst_9 : f32 to vector<128x128xf32>
    %15 = arith.mulf %13, %14 : vector<128x128xf32>
    %cst_10 = arith.constant 2.000000e+01 : f32
    %16 = vector.broadcast %cst_10 : f32 to vector<128x128xf32>
    %17 = arith.mulf %16, %15 : vector<128x128xf32>
    %cst_11 = arith.constant -5.000000e+01 : f32
    %cst_12 = arith.constant 8.000000e+01 : f32
    %18 = vector.broadcast %cst_11 : f32 to vector<128x128xf32>
    %19 = arith.maximumf %18, %17 : vector<128x128xf32>
    %20 = vector.broadcast %cst_12 : f32 to vector<128x128xf32>
    %21 = arith.minimumf %20, %19 : vector<128x128xf32>
    %c0_13 = arith.constant 0 : index
    %c0_14 = arith.constant 0 : index
    %22 = vector.load %arg5[%c0_13, %c0_14] : memref<128x128xf32, #tpu.memory_space<vmem>>, vector<128x128xf32>
    tpu.vector_store %arg5[%c0_13, %c0_14], %21 {strides = array<i32>} : memref<128x128xf32, #tpu.memory_space<vmem>>, vector<128x128xf32>,
    return
  }
  func.func @transform_0(%arg0: i32) -> (i32, i32) {
    %c0_i32 = arith.constant 0 : i32
    %c0_i32_0 = arith.constant 0 : i32
    return %arg0, %c0_i32 : i32, i32
  }
  func.func @transform_1(%arg0: i32) -> (i32, i32) {
    %c0_i32 = arith.constant 0 : i32
    %c0_i32_0 = arith.constant 0 : i32
    %c0_i32_1 = arith.constant 0 : i32
    return %c0_i32, %c0_i32_0 : i32, i32
  }
  func.func @transform_2(%arg0: i32) -> (i32, i32) {
    %c0_i32 = arith.constant 0 : i32
    %c0_i32_0 = arith.constant 0 : i32
    %c0_i32_1 = arith.constant 0 : i32
    return %c0_i32, %c0_i32_0 : i32, i32
  }
  func.func @transform_3(%arg0: i32) -> (i32, i32) {
    %c0_i32 = arith.constant 0 : i32
    %c0_i32_0 = arith.constant 0 : i32
    return %arg0, %c0_i32 : i32, i32
  }
  func.func @transform_4(%arg0: i32) -> (i32, i32) {
    %c0_i32 = arith.constant 0 : i32
    %c0_i32_0 = arith.constant 0 : i32
    return %arg0, %c0_i32 : i32, i32
  }
}

</mosaic_0001>

<llo_original>
// kernel: tpu_custom_call.1
$region0: #{tpu_custom_call.1}
  #allocation0 [shape = 'u32[]', space=smem, size = 0x4, offset = 0x4, fixed_abs, tag = 'smem constant byte address 0x4 - core index']
  #allocation1 [shape = 'u32[72,128]{1,0:T(1,128)}', space=vmem, size = 0x9000, scoped, tag = 'internal scratch']
  %s0 = inlined_call_operand.hbm [shape: f32[128,256], index: 0, kind: input, shape index: {}]
  %s1 = inlined_call_operand.hbm [shape: f32[256,256], index: 1, kind: input, shape index: {}]
  %s2 = inlined_call_operand.hbm [shape: f32[128,128], index: 2, kind: input, shape index: {}]
  %s3 = inlined_call_operand.hbm [shape: f32[128,128], index: 3, kind: output, shape index: {0}]
  %s4 = inlined_call_operand.hbm [shape: f32[128,128], index: 4, kind: output, shape index: {1}]
  %5 = xla_tuple %s3, %s4
  %s6 = sld [smem:[#allocation0]]
  $region42: #{tpu_custom_call.1} parent=0
    _
  %s8 = ssub.s32 1, %s6
  %s9 = scalar_select 0, %s8, %s6
  $region1: #{tpu_custom_call.1} parent=0
    #allocation2 [shape = 'u8[131072]{0}', space=vmem, size = 0x20000, scoped, tag = 'input window, operand 0, single buffered']
    #allocation3 [shape = 's32[1]{0}', space=sflag, size = 0x4, scoped, tag = 'scoped memory for tpu_custom_call.1']
    #allocation4 [shape = 's32[1]{0}', space=sflag, size = 0x4, scoped, tag = 'scoped memory for tpu_custom_call.1']
    #allocation5 [shape = 'u8[262144]{0}', space=vmem, size = 0x40000, scoped, tag = 'input window, operand 1, single buffered']
    #allocation6 [shape = 's32[1]{0}', space=sflag, size = 0x4, scoped, tag = 'scoped memory for tpu_custom_call.1']
    #allocation7 [shape = 'u8[65536]{0}', space=vmem, size = 0x10000, scoped, tag = 'input window, operand 2, single buffered']
    #allocation8 [shape = 'u8[65536]{0}', space=vmem, size = 0x10000, scoped, tag = 'output window, operand 0, single buffered']
    #allocation9 [shape = 'u8[65536]{0}', space=vmem, size = 0x10000, scoped, tag = 'output window, operand 1, single buffered']
    #allocation10 [shape = 's32[1]{0}', space=sflag, size = 0x4, scoped, tag = 'scoped memory for tpu_custom_call.1']
    %10 = vsyncpa [#allocation3], 0
    %11 = vsyncpa [#allocation6], 0
    %12 = vsyncpa [#allocation4], 0
    %13 = vsyncpa [#allocation10], 0
    // Predicated region
    $region2: #{tpu_custom_call.1} parent=1 // pred_check
      _
    $region3: #{tpu_custom_call.1} parent=1 // pred_check_branch
      %15 = sbr.rel (0) target = $region5
    $region4: #{tpu_custom_call.1} parent=1 // pred_region
      %17 = vsyncadd [#allocation3], 0
      %s18 = sshll.u32 %s0, 4
      %s19 = int_to_ptr.hbm [resolvable:$true] %s18
      %s20 = sshll.u32 [#allocation2], 4
      %s21 = int_to_ptr.vmem [resolvable:$true] %s20
      %26 = dma.hbm_to_vmem [thread:$0]  %s19, 4096, %s21, [#allocation3], 256, 256, 16
    $region5: #{tpu_custom_call.1} parent=1 // pred_fallthru
      _
    // Predicated region
    $region6: #{tpu_custom_call.1} parent=1 // pred_check
      _
    $region7: #{tpu_custom_call.1} parent=1 // pred_check_branch
      %28 = sbr.rel (0) target = $region9
    $region8: #{tpu_custom_call.1} parent=1 // pred_region
      %30 = vsyncadd [#allocation6], 0
      %s31 = sshll.u32 %s1, 4
      %s32 = int_to_ptr.hbm [resolvable:$true] %s31
      %s33 = sshll.u32 [#allocation5], 4
      %s34 = int_to_ptr.vmem [resolvable:$true] %s33
      %39 = dma.hbm_to_vmem [thread:$0]  %s32, 8192, %s34, [#allocation6], 256, 256, 16
    $region9: #{tpu_custom_call.1} parent=1 // pred_fallthru
      _
    // Predicated region
    $region10: #{tpu_custom_call.1} parent=1 // pred_check
      _
    $region11: #{tpu_custom_call.1} parent=1 // pred_check_branch
      %41 = sbr.rel (0) target = $region13
    $region12: #{tpu_custom_call.1} parent=1 // pred_region
      %43 = vsyncadd [#allocation6], 0
      %s44 = sshll.u32 %s2, 4
      %s45 = int_to_ptr.hbm [resolvable:$true] %s44
      %s46 = sshll.u32 [#allocation7], 4
      %s47 = int_to_ptr.vmem [resolvable:$true] %s46
      %52 = dma.hbm_to_vmem [thread:$0]  %s45, 2048, %s47, [#allocation6], 128, 128, 8
    $region13: #{tpu_custom_call.1} parent=1 // pred_fallthru
      _
    // Predicated region
    $region14: #{tpu_custom_call.1} parent=1 // pred_check
      _
    $region15: #{tpu_custom_call.1} parent=1 // pred_check_branch
      %54 = sbr.rel (0) target = $region17
    $region16: #{tpu_custom_call.1} parent=1 // pred_region
      %56 = dma.done [#allocation3], 4096
    $region17: #{tpu_custom_call.1} parent=1 // pred_fallthru
      _
    // Predicated region
    $region18: #{tpu_custom_call.1} parent=1 // pred_check
      _
    $region19: #{tpu_custom_call.1} parent=1 // pred_check_branch
      %58 = sbr.rel (0) target = $region21
    $region20: #{tpu_custom_call.1} parent=1 // pred_region
      %60 = dma.done [#allocation6], 8192
    $region21: #{tpu_custom_call.1} parent=1 // pred_fallthru
      _
    // Predicated region
    $region22: #{tpu_custom_call.1} parent=1 // pred_check
      _
    $region23: #{tpu_custom_call.1} parent=1 // pred_check_branch
      %62 = sbr.rel (0) target = $region25
    $region24: #{tpu_custom_call.1} parent=1 // pred_region
      %64 = dma.done [#allocation6], 2048
    $region25: #{tpu_custom_call.1} parent=1 // pred_fallthru
      _
    %v65 = vld [vmem:[#allocation2] sm:$0xff]
    %v66 = vld [vmem:[#allocation2 + $0x8] sm:$0xff]
    %v67 = vld [vmem:[#allocation2 + $0x10] sm:$0xff]
    %v68 = vld [vmem:[#allocation2 + $0x18] sm:$0xff]
    %v69 = vld [vmem:[#allocation2 + $0x20] sm:$0xff]
    %v70 = vld [vmem:[#allocation2 + $0x28] sm:$0xff]
    %v71 = vld [vmem:[#allocation2 + $0x30] sm:$0xff]
    %v72 = vld [vmem:[#allocation2 + $0x38] sm:$0xff]
    %v73 = vld [vmem:[#allocation2 + $0x40] sm:$0xff]
    %v74 = vld [vmem:[#allocation2 + $0x48] sm:$0xff]
    %v75 = vld [vmem:[#allocation2 + $0x50] sm:$0xff]
    %v76 = vld [vmem:[#allocation2 + $0x58] sm:$0xff]
    %v77 = vld [vmem:[#allocation2 + $0x60] sm:$0xff]
    %v78 = vld [vmem:[#allocation2 + $0x68] sm:$0xff]
    %v79 = vld [vmem:[#allocation2 + $0x70] sm:$0xff]
    %v80 = vld [vmem:[#allocation2 + $0x78] sm:$0xff]
    %v81 = vld [vmem:[#allocation2 + $0x80] sm:$0xff]
    %v82 = vld [vmem:[#allocation2 + $0x88] sm:$0xff]
    %v83 = vld [vmem:[#allocation2 + $0x90] sm:$0xff]
    %v84 = vld [vmem:[#allocation2 + $0x98] sm:$0xff]
    %v85 = vld [vmem:[#allocation2 + $0xa0] sm:$0xff]
    %v86 = vld [vmem:[#allocation2 + $0xa8] sm:$0xff]
    %v87 = vld [vmem:[#allocation2 + $0xb0] sm:$0xff]
    %v88 = vld [vmem:[#allocation2 + $0xb8] sm:$0xff]
    %v89 = vld [vmem:[#allocation2 + $0xc0] sm:$0xff]
    %v90 = vld [vmem:[#allocation2 + $0xc8] sm:$0xff]
    %v91 = vld [vmem:[#allocation2 + $0xd0] sm:$0xff]
    %v92 = vld [vmem:[#allocation2 + $0xd8] sm:$0xff]
    %v93 = vld [vmem:[#allocation2 + $0xe0] sm:$0xff]
    %v94 = vld [vmem:[#allocation2 + $0xe8] sm:$0xff]
    %v95 = vld [vmem:[#allocation2 + $0xf0] sm:$0xff]
    %v96 = vld [vmem:[#allocation2 + $0xf8] sm:$0xff]
    %v97 = vld [vmem:[#allocation5] sm:$0xff]
    %v98 = vld [vmem:[#allocation5 + $0x8] sm:$0xff]
    %v99 = vld [vmem:[#allocation5 + $0x10] sm:$0xff]
    %v100 = vld [vmem:[#allocation5 + $0x18] sm:$0xff]
    %v101 = vld [vmem:[#allocation5 + $0x20] sm:$0xff]
    %v102 = vld [vmem:[#allocation5 + $0x28] sm:$0xff]
    %v103 = vld [vmem:[#allocation5 + $0x30] sm:$0xff]
    %v104 = vld [vmem:[#allocation5 + $0x38] sm:$0xff]
    %v105 = vld [vmem:[#allocation5 + $0x40] sm:$0xff]
    %v106 = vld [vmem:[#allocation5 + $0x48] sm:$0xff]
    %v107 = vld [vmem:[#allocation5 + $0x50] sm:$0xff]
    %v108 = vld [vmem:[#allocation5 + $0x58] sm:$0xff]
    %v109 = vld [vmem:[#allocation5 + $0x60] sm:$0xff]
    %v110 = vld [vmem:[#allocation5 + $0x68] sm:$0xff]
    %v111 = vld [vmem:[#allocation5 + $0x70] sm:$0xff]
    %v112 = vld [vmem:[#allocation5 + $0x78] sm:$0xff]
    %v113 = vld [vmem:[#allocation5 + $0x80] sm:$0xff]
    %v114 = vld [vmem:[#allocation5 + $0x88] sm:$0xff]
    %v115 = vld [vmem:[#allocation5 + $0x90] sm:$0xff]
    %v116 = vld [vmem:[#allocation5 + $0x98] sm:$0xff]
    %v117 = vld [vmem:[#allocation5 + $0xa0] sm:$0xff]
    %v118 = vld [vmem:[#allocation5 + $0xa8] sm:$0xff]
    %v119 = vld [vmem:[#allocation5 + $0xb0] sm:$0xff]
    %v120 = vld [vmem:[#allocation5 + $0xb8] sm:$0xff]
    %v121 = vld [vmem:[#allocation5 + $0xc0] sm:$0xff]
    %v122 = vld [vmem:[#allocation5 + $0xc8] sm:$0xff]
    %v123 = vld [vmem:[#allocation5 + $0xd0] sm:$0xff]
    %v124 = vld [vmem:[#allocation5 + $0xd8] sm:$0xff]
    %v125 = vld [vmem:[#allocation5 + $0xe0] sm:$0xff]
    %v126 = vld [vmem:[#allocation5 + $0xe8] sm:$0xff]
    %v127 = vld [vmem:[#allocation5 + $0xf0] sm:$0xff]
    %v128 = vld [vmem:[#allocation5 + $0xf8] sm:$0xff]
    %v129 = vld [vmem:[#allocation5 + $0x100] sm:$0xff]
    %v130 = vld [vmem:[#allocation5 + $0x108] sm:$0xff]
    %v131 = vld [vmem:[#allocation5 + $0x110] sm:$0xff]
    %v132 = vld [vmem:[#allocation5 + $0x118] sm:$0xff]
    %v133 = vld [vmem:[#allocation5 + $0x120] sm:$0xff]
    %v134 = vld [vmem:[#allocation5 + $0x128] sm:$0xff]
    %v135 = vld [vmem:[#allocation5 + $0x130] sm:$0xff]
    %v136 = vld [vmem:[#allocation5 + $0x138] sm:$0xff]
    %v137 = vld [vmem:[#allocation5 + $0x140] sm:$0xff]
    %v138 = vld [vmem:[#allocation5 + $0x148] sm:$0xff]
    %v139 = vld [vmem:[#allocation5 + $0x150] sm:$0xff]
    %v140 = vld [vmem:[#allocation5 + $0x158] sm:$0xff]
    %v141 = vld [vmem:[#allocation5 + $0x160] sm:$0xff]
    %v142 = vld [vmem:[#allocation5 + $0x168] sm:$0xff]
    %v143 = vld [vmem:[#allocation5 + $0x170] sm:$0xff]
    %v144 = vld [vmem:[#allocation5 + $0x178] sm:$0xff]
    %v145 = vld [vmem:[#allocation5 + $0x180] sm:$0xff]
    %v146 = vld [vmem:[#allocation5 + $0x188] sm:$0xff]
    %v147 = vld [vmem:[#allocation5 + $0x190] sm:$0xff]
    %v148 = vld [vmem:[#allocation5 + $0x198] sm:$0xff]
    %v149 = vld [vmem:[#allocation5 + $0x1a0] sm:$0xff]
    %v150 = vld [vmem:[#allocation5 + $0x1a8] sm:$0xff]
    %v151 = vld [vmem:[#allocation5 + $0x1b0] sm:$0xff]
    %v152 = vld [vmem:[#allocation5 + $0x1b8] sm:$0xff]
    %v153 = vld [vmem:[#allocation5 + $0x1c0] sm:$0xff]
    %v154 = vld [vmem:[#allocation5 + $0x1c8] sm:$0xff]
    %v155 = vld [vmem:[#allocation5 + $0x1d0] sm:$0xff]
    %v156 = vld [vmem:[#allocation5 + $0x1d8] sm:$0xff]
    %v157 = vld [vmem:[#allocation5 + $0x1e0] sm:$0xff]
    %v158 = vld [vmem:[#allocation5 + $0x1e8] sm:$0xff]
    %v159 = vld [vmem:[#allocation5 + $0x1f0] sm:$0xff]
    %v160 = vld [vmem:[#allocation5 + $0x1f8] sm:$0xff]
    %161 = vmatpush.msra.mxu0 %v127
    %162 = vmatpush.msra.mxu0 %v125
    %163 = vmatpush.msra.mxu0 %v123
    %164 = vmatpush.msra.mxu0 %v121
    %165 = vmatpush.msra.mxu0 %v119
    %166 = vmatpush.msra.mxu0 %v117
    %167 = vmatpush.msra.mxu0 %v115
    %168 = vmatpush.msra.mxu0 %v113
    %169 = vmatpush.msra.mxu0 %v111
    %170 = vmatpush.msra.mxu0 %v109
    %171 = vmatpush.msra.mxu0 %v107
    %172 = vmatpush.msra.mxu0 %v105
    %173 = vmatpush.msra.mxu0 %v103
    %174 = vmatpush.msra.mxu0 %v101
    %175 = vmatpush.msra.mxu0 %v99
    %176 = vmatpush.msra.mxu0 %v97
    %177 = vmatmul.f32.gmra.mxu0 %v65
    %v178 = vpop.f32.mrf.mxu0
    %v179 = vadd.f32 0.0, %v178
    %180 = vmatmul.f32.gmra.mxu0 %v67
    %v181 = vpop.f32.mrf.mxu0
    %v182 = vadd.f32 0.0, %v181
    %183 = vmatmul.f32.gmra.mxu0 %v69
    %v184 = vpop.f32.mrf.mxu0
    %v185 = vadd.f32 0.0, %v184
    %186 = vmatmul.f32.gmra.mxu0 %v71
    %v187 = vpop.f32.mrf.mxu0
    %v188 = vadd.f32 0.0, %v187
    %189 = vmatmul.f32.gmra.mxu0 %v73
    %v190 = vpop.f32.mrf.mxu0
    %v191 = vadd.f32 0.0, %v190
    %192 = vmatmul.f32.gmra.mxu0 %v75
    %v193 = vpop.f32.mrf.mxu0
    %v194 = vadd.f32 0.0, %v193
    %195 = vmatmul.f32.gmra.mxu0 %v77
    %v196 = vpop.f32.mrf.mxu0
    %v197 = vadd.f32 0.0, %v196
    %198 = vmatmul.f32.gmra.mxu0 %v79
    %v199 = vpop.f32.mrf.mxu0
    %v200 = vadd.f32 0.0, %v199
    %201 = vmatmul.f32.gmra.mxu0 %v81
    %v202 = vpop.f32.mrf.mxu0
    %v203 = vadd.f32 0.0, %v202
    %204 = vmatmul.f32.gmra.mxu0 %v83
    %v205 = vpop.f32.mrf.mxu0
    %v206 = vadd.f32 0.0, %v205
    %207 = vmatmul.f32.gmra.mxu0 %v85
    %v208 = vpop.f32.mrf.mxu0
    %v209 = vadd.f32 0.0, %v208
    %210 = vmatmul.f32.gmra.mxu0 %v87
    %v211 = vpop.f32.mrf.mxu0
    %v212 = vadd.f32 0.0, %v211
    %213 = vmatmul.f32.gmra.mxu0 %v89
    %v214 = vpop.f32.mrf.mxu0
    %v215 = vadd.f32 0.0, %v214
    %216 = vmatmul.f32.gmra.mxu0 %v91
    %v217 = vpop.f32.mrf.mxu0
    %v218 = vadd.f32 0.0, %v217
    %219 = vmatmul.f32.gmra.mxu0 %v93
    %v220 = vpop.f32.mrf.mxu0
    %v221 = vadd.f32 0.0, %v220
    %222 = vmatmul.f32.gmra.mxu0 %v95
    %v223 = vpop.f32.mrf.mxu0
    %v224 = vadd.f32 0.0, %v223
    %225 = vdwg.mxu0
    %226 = vmatpush.msra.mxu0 %v159
    %227 = vmatpush.msra.mxu0 %v157
    %228 = vmatpush.msra.mxu0 %v155
    %229 = vmatpush.msra.mxu0 %v153
    %230 = vmatpush.msra.mxu0 %v151
    %231 = vmatpush.msra.mxu0 %v149
    %232 = vmatpush.msra.mxu0 %v147
    %233 = vmatpush.msra.mxu0 %v145
    %234 = vmatpush.msra.mxu0 %v143
    %235 = vmatpush.msra.mxu0 %v141
    %236 = vmatpush.msra.mxu0 %v139
    %237 = vmatpush.msra.mxu0 %v137
    %238 = vmatpush.msra.mxu0 %v135
    %239 = vmatpush.msra.mxu0 %v133
    %240 = vmatpush.msra.mxu0 %v131
    %241 = vmatpush.msra.mxu0 %v129
    %242 = vmatmul.f32.gmra.mxu0 %v66
    %v243 = vpop.f32.mrf.mxu0
    %v244 = vadd.f32 %v179, %v243
    %245 = vmatmul.f32.gmra.mxu0 %v68
    %v246 = vpop.f32.mrf.mxu0
    %v247 = vadd.f32 %v182, %v246
    %248 = vmatmul.f32.gmra.mxu0 %v70
    %v249 = vpop.f32.mrf.mxu0
    %v250 = vadd.f32 %v185, %v249
    %251 = vmatmul.f32.gmra.mxu0 %v72
    %v252 = vpop.f32.mrf.mxu0
    %v253 = vadd.f32 %v188, %v252
    %254 = vmatmul.f32.gmra.mxu0 %v74
    %v255 = vpop.f32.mrf.mxu0
    %v256 = vadd.f32 %v191, %v255
    %257 = vmatmul.f32.gmra.mxu0 %v76
    %v258 = vpop.f32.mrf.mxu0
    %v259 = vadd.f32 %v194, %v258
    %260 = vmatmul.f32.gmra.mxu0 %v78
    %v261 = vpop.f32.mrf.mxu0
    %v262 = vadd.f32 %v197, %v261
    %263 = vmatmul.f32.gmra.mxu0 %v80
    %v264 = vpop.f32.mrf.mxu0
    %v265 = vadd.f32 %v200, %v264
    %266 = vmatmul.f32.gmra.mxu0 %v82
    %v267 = vpop.f32.mrf.mxu0
    %v268 = vadd.f32 %v203, %v267
    %269 = vmatmul.f32.gmra.mxu0 %v84
    %v270 = vpop.f32.mrf.mxu0
    %v271 = vadd.f32 %v206, %v270
    %272 = vmatmul.f32.gmra.mxu0 %v86
    %v273 = vpop.f32.mrf.mxu0
    %v274 = vadd.f32 %v209, %v273
    %275 = vmatmul.f32.gmra.mxu0 %v88
    %v276 = vpop.f32.mrf.mxu0
    %v277 = vadd.f32 %v212, %v276
    %278 = vmatmul.f32.gmra.mxu0 %v90
    %v279 = vpop.f32.mrf.mxu0
    %v280 = vadd.f32 %v215, %v279
    %281 = vmatmul.f32.gmra.mxu0 %v92
    %v282 = vpop.f32.mrf.mxu0
    %v283 = vadd.f32 %v218, %v282
    %284 = vmatmul.f32.gmra.mxu0 %v94
    %v285 = vpop.f32.mrf.mxu0
    %v286 = vadd.f32 %v221, %v285
    %287 = vmatmul.f32.gmra.mxu0 %v96
    %v288 = vpop.f32.mrf.mxu0
    %v289 = vadd.f32 %v224, %v288
    %290 = vdwg.mxu0
    %291 = vmatpush.msra.mxu0 %v128
    %292 = vmatpush.msra.mxu0 %v126
    %293 = vmatpush.msra.mxu0 %v124
    %294 = vmatpush.msra.mxu0 %v122
    %295 = vmatpush.msra.mxu0 %v120
    %296 = vmatpush.msra.mxu0 %v118
    %297 = vmatpush.msra.mxu0 %v116
    %298 = vmatpush.msra.mxu0 %v114
    %299 = vmatpush.msra.mxu0 %v112
    %300 = vmatpush.msra.mxu0 %v110
    %301 = vmatpush.msra.mxu0 %v108
    %302 = vmatpush.msra.mxu0 %v106
    %303 = vmatpush.msra.mxu0 %v104
    %304 = vmatpush.msra.mxu0 %v102
    %305 = vmatpush.msra.mxu0 %v100
    %306 = vmatpush.msra.mxu0 %v98
    %307 = vmatmul.f32.gmra.mxu0 %v65
    %v308 = vpop.f32.mrf.mxu0
    %v309 = vadd.f32 0.0, %v308
    %310 = vmatmul.f32.gmra.mxu0 %v67
    %v311 = vpop.f32.mrf.mxu0
    %v312 = vadd.f32 0.0, %v311
    %313 = vmatmul.f32.gmra.mxu0 %v69
    %v314 = vpop.f32.mrf.mxu0
    %v315 = vadd.f32 0.0, %v314
    %316 = vmatmul.f32.gmra.mxu0 %v71
    %v317 = vpop.f32.mrf.mxu0
    %v318 = vadd.f32 0.0, %v317
    %319 = vmatmul.f32.gmra.mxu0 %v73
    %v320 = vpop.f32.mrf.mxu0
    %v321 = vadd.f32 0.0, %v320
    %322 = vmatmul.f32.gmra.mxu0 %v75
    %v323 = vpop.f32.mrf.mxu0
    %v324 = vadd.f32 0.0, %v323
    %325 = vmatmul.f32.gmra.mxu0 %v77
    %v326 = vpop.f32.mrf.mxu0
    %v327 = vadd.f32 0.0, %v326
    %328 = vmatmul.f32.gmra.mxu0 %v79
    %v329 = vpop.f32.mrf.mxu0
    %v330 = vadd.f32 0.0, %v329
    %331 = vmatmul.f32.gmra.mxu0 %v81
    %v332 = vpop.f32.mrf.mxu0
    %v333 = vadd.f32 0.0, %v332
    %334 = vmatmul.f32.gmra.mxu0 %v83
    %v335 = vpop.f32.mrf.mxu0
    %v336 = vadd.f32 0.0, %v335
    %337 = vmatmul.f32.gmra.mxu0 %v85
    %v338 = vpop.f32.mrf.mxu0
    %v339 = vadd.f32 0.0, %v338
    %340 = vmatmul.f32.gmra.mxu0 %v87
    %v341 = vpop.f32.mrf.mxu0
    %v342 = vadd.f32 0.0, %v341
    %343 = vmatmul.f32.gmra.mxu0 %v89
    %v344 = vpop.f32.mrf.mxu0
    %v345 = vadd.f32 0.0, %v344
    %346 = vmatmul.f32.gmra.mxu0 %v91
    %v347 = vpop.f32.mrf.mxu0
    %v348 = vadd.f32 0.0, %v347
    %349 = vmatmul.f32.gmra.mxu0 %v93
    %v350 = vpop.f32.mrf.mxu0
    %v351 = vadd.f32 0.0, %v350
    %352 = vmatmul.f32.gmra.mxu0 %v95
    %v353 = vpop.f32.mrf.mxu0
    %v354 = vadd.f32 0.0, %v353
    %355 = vdwg.mxu0
    %356 = vmatpush.msra.mxu0 %v160
    %357 = vmatpush.msra.mxu0 %v158
    %358 = vmatpush.msra.mxu0 %v156
    %359 = vmatpush.msra.mxu0 %v154
    %360 = vmatpush.msra.mxu0 %v152
    %361 = vmatpush.msra.mxu0 %v150
    %362 = vmatpush.msra.mxu0 %v148
    %363 = vmatpush.msra.mxu0 %v146
    %364 = vmatpush.msra.mxu0 %v144
    %365 = vmatpush.msra.mxu0 %v142
    %366 = vmatpush.msra.mxu0 %v140
    %367 = vmatpush.msra.mxu0 %v138
    %368 = vmatpush.msra.mxu0 %v136
    %369 = vmatpush.msra.mxu0 %v134
    %370 = vmatpush.msra.mxu0 %v132
    %371 = vmatpush.msra.mxu0 %v130
    %372 = vmatmul.f32.gmra.mxu0 %v66
    %v373 = vpop.f32.mrf.mxu0
    %v374 = vadd.f32 %v309, %v373
    %375 = vmatmul.f32.gmra.mxu0 %v68
    %v376 = vpop.f32.mrf.mxu0
    %v377 = vadd.f32 %v312, %v376
    %378 = vmatmul.f32.gmra.mxu0 %v70
    %v379 = vpop.f32.mrf.mxu0
    %v380 = vadd.f32 %v315, %v379
    %381 = vmatmul.f32.gmra.mxu0 %v72
    %v382 = vpop.f32.mrf.mxu0
    %v383 = vadd.f32 %v318, %v382
    %384 = vmatmul.f32.gmra.mxu0 %v74
    %v385 = vpop.f32.mrf.mxu0
    %v386 = vadd.f32 %v321, %v385
    %387 = vmatmul.f32.gmra.mxu0 %v76
    %v388 = vpop.f32.mrf.mxu0
    %v389 = vadd.f32 %v324, %v388
    %390 = vmatmul.f32.gmra.mxu0 %v78
    %v391 = vpop.f32.mrf.mxu0
    %v392 = vadd.f32 %v327, %v391
    %393 = vmatmul.f32.gmra.mxu0 %v80
    %v394 = vpop.f32.mrf.mxu0
    %v395 = vadd.f32 %v330, %v394
    %396 = vmatmul.f32.gmra.mxu0 %v82
    %v397 = vpop.f32.mrf.mxu0
    %v398 = vadd.f32 %v333, %v397
    %399 = vmatmul.f32.gmra.mxu0 %v84
    %v400 = vpop.f32.mrf.mxu0
    %v401 = vadd.f32 %v336, %v400
    %402 = vmatmul.f32.gmra.mxu0 %v86
    %v403 = vpop.f32.mrf.mxu0
    %v404 = vadd.f32 %v339, %v403
    %405 = vmatmul.f32.gmra.mxu0 %v88
    %v406 = vpop.f32.mrf.mxu0
    %v407 = vadd.f32 %v342, %v406
    %408 = vmatmul.f32.gmra.mxu0 %v90
    %v409 = vpop.f32.mrf.mxu0
    %v410 = vadd.f32 %v345, %v409
    %411 = vmatmul.f32.gmra.mxu0 %v92
    %v412 = vpop.f32.mrf.mxu0
    %v413 = vadd.f32 %v348, %v412
    %414 = vmatmul.f32.gmra.mxu0 %v94
    %v415 = vpop.f32.mrf.mxu0
    %v416 = vadd.f32 %v351, %v415
    %417 = vmatmul.f32.gmra.mxu0 %v96
    %v418 = vpop.f32.mrf.mxu0
    %v419 = vadd.f32 %v354, %v418
    %420 = vdwg.mxu0
    %v421 = vmul.f32 %v244, %v244
    %v422 = vmul.f32 %v374, %v374
    %v423 = vmul.f32 %v247, %v247
    %v424 = vmul.f32 %v377, %v377
    %v425 = vmul.f32 %v250, %v250
    %v426 = vmul.f32 %v380, %v380
    %v427 = vmul.f32 %v253, %v253
    %v428 = vmul.f32 %v383, %v383
    %v429 = vmul.f32 %v256, %v256
    %v430 = vmul.f32 %v386, %v386
    %v431 = vmul.f32 %v259, %v259
    %v432 = vmul.f32 %v389, %v389
    %v433 = vmul.f32 %v262, %v262
    %v434 = vmul.f32 %v392, %v392
    %v435 = vmul.f32 %v265, %v265
    %v436 = vmul.f32 %v395, %v395
    %v437 = vmul.f32 %v268, %v268
    %v438 = vmul.f32 %v398, %v398
    %v439 = vmul.f32 %v271, %v271
    %v440 = vmul.f32 %v401, %v401
    %v441 = vmul.f32 %v274, %v274
    %v442 = vmul.f32 %v404, %v404
    %v443 = vmul.f32 %v277, %v277
    %v444 = vmul.f32 %v407, %v407
    %v445 = vmul.f32 %v280, %v280
    %v446 = vmul.f32 %v410, %v410
    %v447 = vmul.f32 %v283, %v283
    %v448 = vmul.f32 %v413, %v413
    %v449 = vmul.f32 %v286, %v286
    %v450 = vmul.f32 %v416, %v416
    %v451 = vmul.f32 %v289, %v289
    %v452 = vmul.f32 %v419, %v419
    %v453 = vadd.f32 %v421, %v422
    %v454 = vadd.f32 %v423, %v424
    %v455 = vadd.f32 %v425, %v426
    %v456 = vadd.f32 %v427, %v428
    %v457 = vadd.f32 %v429, %v430
    %v458 = vadd.f32 %v431, %v432
    %v459 = vadd.f32 %v433, %v434
    %v460 = vadd.f32 %v435, %v436
    %v461 = vadd.f32 %v437, %v438
    %v462 = vadd.f32 %v439, %v440
    %v463 = vadd.f32 %v441, %v442
    %v464 = vadd.f32 %v443, %v444
    %v465 = vadd.f32 %v445, %v446
    %v466 = vadd.f32 %v447, %v448
    %v467 = vadd.f32 %v449, %v450
    %v468 = vadd.f32 %v451, %v452
    %v469 = vrsqrt.pop %v453
    %v470 = vmul.f32 %v469, %v453
    %v471 = vmul.f32 %v470, %v469
    %v472 = vmul.f32 0.5, %v471
    %v473 = vsub.f32 1.5, %v472
    %v474 = vmul.f32 %v469, %v473
    %v475 = vmul.f32 %v453, %v474
    %vm476 = vcmp.eq.f32.partialorder %v453, inf
    %v477 = vsel %vm476, %v453, %v475
    %vm478 = vcmp.eq.f32.partialorder %v453, 0.0
    %v479 = vand.u32 %v453, 2147483648
    %v480 = vsel %vm478, %v479, %v477
    %v481 = vrsqrt.pop %v454
    %v482 = vmul.f32 %v481, %v454
    %v483 = vmul.f32 %v482, %v481
    %v484 = vmul.f32 0.5, %v483
    %v485 = vsub.f32 1.5, %v484
    %v486 = vmul.f32 %v481, %v485
    %v487 = vmul.f32 %v454, %v486
    %vm488 = vcmp.eq.f32.partialorder %v454, inf
    %v489 = vsel %vm488, %v454, %v487
    %vm490 = vcmp.eq.f32.partialorder %v454, 0.0
    %v491 = vand.u32 %v454, 2147483648
    %v492 = vsel %vm490, %v491, %v489
    %v493 = vrsqrt.pop %v455
    %v494 = vmul.f32 %v493, %v455
    %v495 = vmul.f32 %v494, %v493
    %v496 = vmul.f32 0.5, %v495
    %v497 = vsub.f32 1.5, %v496
    %v498 = vmul.f32 %v493, %v497
    %v499 = vmul.f32 %v455, %v498
    %vm500 = vcmp.eq.f32.partialorder %v455, inf
    %v501 = vsel %vm500, %v455, %v499
    %vm502 = vcmp.eq.f32.partialorder %v455, 0.0
    %v503 = vand.u32 %v455, 2147483648
    %v504 = vsel %vm502, %v503, %v501
    %v505 = vrsqrt.pop %v456
    %v506 = vmul.f32 %v505, %v456
    %v507 = vmul.f32 %v506, %v505
    %v508 = vmul.f32 0.5, %v507
    %v509 = vsub.f32 1.5, %v508
    %v510 = vmul.f32 %v505, %v509
    %v511 = vmul.f32 %v456, %v510
    %vm512 = vcmp.eq.f32.partialorder %v456, inf
    %v513 = vsel %vm512, %v456, %v511
    %vm514 = vcmp.eq.f32.partialorder %v456, 0.0
    %v515 = vand.u32 %v456, 2147483648
    %v516 = vsel %vm514, %v515, %v513
    %v517 = vrsqrt.pop %v457
    %v518 = vmul.f32 %v517, %v457
    %v519 = vmul.f32 %v518, %v517
    %v520 = vmul.f32 0.5, %v519
    %v521 = vsub.f32 1.5, %v520
    %v522 = vmul.f32 %v517, %v521
    %v523 = vmul.f32 %v457, %v522
    %vm524 = vcmp.eq.f32.partialorder %v457, inf
    %v525 = vsel %vm524, %v457, %v523
    %vm526 = vcmp.eq.f32.partialorder %v457, 0.0
    %v527 = vand.u32 %v457, 2147483648
    %v528 = vsel %vm526, %v527, %v525
    %v529 = vrsqrt.pop %v458
    %v530 = vmul.f32 %v529, %v458
    %v531 = vmul.f32 %v530, %v529
    %v532 = vmul.f32 0.5, %v531
    %v533 = vsub.f32 1.5, %v532
    %v534 = vmul.f32 %v529, %v533
    %v535 = vmul.f32 %v458, %v534
    %vm536 = vcmp.eq.f32.partialorder %v458, inf
    %v537 = vsel %vm536, %v458, %v535
    %vm538 = vcmp.eq.f32.partialorder %v458, 0.0
    %v539 = vand.u32 %v458, 2147483648
    %v540 = vsel %vm538, %v539, %v537
    %v541 = vrsqrt.pop %v459
    %v542 = vmul.f32 %v541, %v459
    %v543 = vmul.f32 %v542, %v541
    %v544 = vmul.f32 0.5, %v543
    %v545 = vsub.f32 1.5, %v544
    %v546 = vmul.f32 %v541, %v545
    %v547 = vmul.f32 %v459, %v546
    %vm548 = vcmp.eq.f32.partialorder %v459, inf
    %v549 = vsel %vm548, %v459, %v547
    %vm550 = vcmp.eq.f32.partialorder %v459, 0.0
    %v551 = vand.u32 %v459, 2147483648
    %v552 = vsel %vm550, %v551, %v549
    %v553 = vrsqrt.pop %v460
    %v554 = vmul.f32 %v553, %v460
    %v555 = vmul.f32 %v554, %v553
    %v556 = vmul.f32 0.5, %v555
    %v557 = vsub.f32 1.5, %v556
    %v558 = vmul.f32 %v553, %v557
    %v559 = vmul.f32 %v460, %v558
    %vm560 = vcmp.eq.f32.partialorder %v460, inf
    %v561 = vsel %vm560, %v460, %v559
    %vm562 = vcmp.eq.f32.partialorder %v460, 0.0
    %v563 = vand.u32 %v460, 2147483648
    %v564 = vsel %vm562, %v563, %v561
    %v565 = vrsqrt.pop %v461
    %v566 = vmul.f32 %v565, %v461
    %v567 = vmul.f32 %v566, %v565
    %v568 = vmul.f32 0.5, %v567
    %v569 = vsub.f32 1.5, %v568
    %v570 = vmul.f32 %v565, %v569
    %v571 = vmul.f32 %v461, %v570
    %vm572 = vcmp.eq.f32.partialorder %v461, inf
    %v573 = vsel %vm572, %v461, %v571
    %vm574 = vcmp.eq.f32.partialorder %v461, 0.0
    %v575 = vand.u32 %v461, 2147483648
    %v576 = vsel %vm574, %v575, %v573
    %v577 = vrsqrt.pop %v462
    %v578 = vmul.f32 %v577, %v462
    %v579 = vmul.f32 %v578, %v577
    %v580 = vmul.f32 0.5, %v579
    %v581 = vsub.f32 1.5, %v580
    %v582 = vmul.f32 %v577, %v581
    %v583 = vmul.f32 %v462, %v582
    %vm584 = vcmp.eq.f32.partialorder %v462, inf
    %v585 = vsel %vm584, %v462, %v583
    %vm586 = vcmp.eq.f32.partialorder %v462, 0.0
    %v587 = vand.u32 %v462, 2147483648
    %v588 = vsel %vm586, %v587, %v585
    %v589 = vrsqrt.pop %v463
    %v590 = vmul.f32 %v589, %v463
    %v591 = vmul.f32 %v590, %v589
    %v592 = vmul.f32 0.5, %v591
    %v593 = vsub.f32 1.5, %v592
    %v594 = vmul.f32 %v589, %v593
    %v595 = vmul.f32 %v463, %v594
    %vm596 = vcmp.eq.f32.partialorder %v463, inf
    %v597 = vsel %vm596, %v463, %v595
    %vm598 = vcmp.eq.f32.partialorder %v463, 0.0
    %v599 = vand.u32 %v463, 2147483648
    %v600 = vsel %vm598, %v599, %v597
    %v601 = vrsqrt.pop %v464
    %v602 = vmul.f32 %v601, %v464
    %v603 = vmul.f32 %v602, %v601
    %v604 = vmul.f32 0.5, %v603
    %v605 = vsub.f32 1.5, %v604
    %v606 = vmul.f32 %v601, %v605
    %v607 = vmul.f32 %v464, %v606
    %vm608 = vcmp.eq.f32.partialorder %v464, inf
    %v609 = vsel %vm608, %v464, %v607
    %vm610 = vcmp.eq.f32.partialorder %v464, 0.0
    %v611 = vand.u32 %v464, 2147483648
    %v612 = vsel %vm610, %v611, %v609
    %v613 = vrsqrt.pop %v465
    %v614 = vmul.f32 %v613, %v465
    %v615 = vmul.f32 %v614, %v613
    %v616 = vmul.f32 0.5, %v615
    %v617 = vsub.f32 1.5, %v616
    %v618 = vmul.f32 %v613, %v617
    %v619 = vmul.f32 %v465, %v618
    %vm620 = vcmp.eq.f32.partialorder %v465, inf
    %v621 = vsel %vm620, %v465, %v619
    %vm622 = vcmp.eq.f32.partialorder %v465, 0.0
    %v623 = vand.u32 %v465, 2147483648
    %v624 = vsel %vm622, %v623, %v621
    %v625 = vrsqrt.pop %v466
    %v626 = vmul.f32 %v625, %v466
    %v627 = vmul.f32 %v626, %v625
    %v628 = vmul.f32 0.5, %v627
    %v629 = vsub.f32 1.5, %v628
    %v630 = vmul.f32 %v625, %v629
    %v631 = vmul.f32 %v466, %v630
    %vm632 = vcmp.eq.f32.partialorder %v466, inf
    %v633 = vsel %vm632, %v466, %v631
    %vm634 = vcmp.eq.f32.partialorder %v466, 0.0
    %v635 = vand.u32 %v466, 2147483648
    %v636 = vsel %vm634, %v635, %v633
    %v637 = vrsqrt.pop %v467
    %v638 = vmul.f32 %v637, %v467
    %v639 = vmul.f32 %v638, %v637
    %v640 = vmul.f32 0.5, %v639
    %v641 = vsub.f32 1.5, %v640
    %v642 = vmul.f32 %v637, %v641
    %v643 = vmul.f32 %v467, %v642
    %vm644 = vcmp.eq.f32.partialorder %v467, inf
    %v645 = vsel %vm644, %v467, %v643
    %vm646 = vcmp.eq.f32.partialorder %v467, 0.0
    %v647 = vand.u32 %v467, 2147483648
    %v648 = vsel %vm646, %v647, %v645
    %v649 = vrsqrt.pop %v468
    %v650 = vmul.f32 %v649, %v468
    %v651 = vmul.f32 %v650, %v649
    %v652 = vmul.f32 0.5, %v651
    %v653 = vsub.f32 1.5, %v652
    %v654 = vmul.f32 %v649, %v653
    %v655 = vmul.f32 %v468, %v654
    %vm656 = vcmp.eq.f32.partialorder %v468, inf
    %v657 = vsel %vm656, %v468, %v655
    %vm658 = vcmp.eq.f32.partialorder %v468, 0.0
    %v659 = vand.u32 %v468, 2147483648
    %v660 = vsel %vm658, %v659, %v657
    %v661 = vld [vmem:[#allocation7] sm:$0xff]
    %v662 = vld [vmem:[#allocation7 + $0x8] sm:$0xff]
    %v663 = vld [vmem:[#allocation7 + $0x10] sm:$0xff]
    %v664 = vld [vmem:[#allocation7 + $0x18] sm:$0xff]
    %v665 = vld [vmem:[#allocation7 + $0x20] sm:$0xff]
    %v666 = vld [vmem:[#allocation7 + $0x28] sm:$0xff]
    %v667 = vld [vmem:[#allocation7 + $0x30] sm:$0xff]
    %v668 = vld [vmem:[#allocation7 + $0x38] sm:$0xff]
    %v669 = vld [vmem:[#allocation7 + $0x40] sm:$0xff]
    %v670 = vld [vmem:[#allocation7 + $0x48] sm:$0xff]
    %v671 = vld [vmem:[#allocation7 + $0x50] sm:$0xff]
    %v672 = vld [vmem:[#allocation7 + $0x58] sm:$0xff]
    %v673 = vld [vmem:[#allocation7 + $0x60] sm:$0xff]
    %v674 = vld [vmem:[#allocation7 + $0x68] sm:$0xff]
    %v675 = vld [vmem:[#allocation7 + $0x70] sm:$0xff]
    %v676 = vld [vmem:[#allocation7 + $0x78] sm:$0xff]
    %677 = vmatpush.msra.mxu0 %v676
    %678 = vmatpush.msra.mxu0 %v675
    %679 = vmatpush.msra.mxu0 %v674
    %680 = vmatpush.msra.mxu0 %v673
    %681 = vmatpush.msra.mxu0 %v672
    %682 = vmatpush.msra.mxu0 %v671
    %683 = vmatpush.msra.mxu0 %v670
    %684 = vmatpush.msra.mxu0 %v669
    %685 = vmatpush.msra.mxu0 %v668
    %686 = vmatpush.msra.mxu0 %v667
    %687 = vmatpush.msra.mxu0 %v666
    %688 = vmatpush.msra.mxu0 %v665
    %689 = vmatpush.msra.mxu0 %v664
    %690 = vmatpush.msra.mxu0 %v663
    %691 = vmatpush.msra.mxu0 %v662
    %692 = vmatpush.msra.mxu0 %v661
    %693 = vmatmul.f32.gmra.mxu0 %v480
    %v694 = vpop.f32.mrf.mxu0
    %v695 = vadd.f32 0.0, %v694
    %696 = vmatmul.f32.gmra.mxu0 %v492
    %v697 = vpop.f32.mrf.mxu0
    %v698 = vadd.f32 0.0, %v697
    %699 = vmatmul.f32.gmra.mxu0 %v504
    %v700 = vpop.f32.mrf.mxu0
    %v701 = vadd.f32 0.0, %v700
    %702 = vmatmul.f32.gmra.mxu0 %v516
    %v703 = vpop.f32.mrf.mxu0
    %v704 = vadd.f32 0.0, %v703
    %705 = vmatmul.f32.gmra.mxu0 %v528
    %v706 = vpop.f32.mrf.mxu0
    %v707 = vadd.f32 0.0, %v706
    %708 = vmatmul.f32.gmra.mxu0 %v540
    %v709 = vpop.f32.mrf.mxu0
    %v710 = vadd.f32 0.0, %v709
    %711 = vmatmul.f32.gmra.mxu0 %v552
    %v712 = vpop.f32.mrf.mxu0
    %v713 = vadd.f32 0.0, %v712
    %714 = vmatmul.f32.gmra.mxu0 %v564
    %v715 = vpop.f32.mrf.mxu0
    %v716 = vadd.f32 0.0, %v715
    %717 = vmatmul.f32.gmra.mxu0 %v576
    %v718 = vpop.f32.mrf.mxu0
    %v719 = vadd.f32 0.0, %v718
    %720 = vmatmul.f32.gmra.mxu0 %v588
    %v721 = vpop.f32.mrf.mxu0
    %v722 = vadd.f32 0.0, %v721
    %723 = vmatmul.f32.gmra.mxu0 %v600
    %v724 = vpop.f32.mrf.mxu0
    %v725 = vadd.f32 0.0, %v724
    %726 = vmatmul.f32.gmra.mxu0 %v612
    %v727 = vpop.f32.mrf.mxu0
    %v728 = vadd.f32 0.0, %v727
    %729 = vmatmul.f32.gmra.mxu0 %v624
    %v730 = vpop.f32.mrf.mxu0
    %v731 = vadd.f32 0.0, %v730
    %732 = vmatmul.f32.gmra.mxu0 %v636
    %v733 = vpop.f32.mrf.mxu0
    %v734 = vadd.f32 0.0, %v733
    %735 = vmatmul.f32.gmra.mxu0 %v648
    %v736 = vpop.f32.mrf.mxu0
    %v737 = vadd.f32 0.0, %v736
    %738 = vmatmul.f32.gmra.mxu0 %v660
    %v739 = vpop.f32.mrf.mxu0
    %v740 = vadd.f32 0.0, %v739
    %741 = vdwg.mxu0
    %742 = vst [vmem:[#allocation8] sm:$0xff] %v695
    %743 = vst [vmem:[#allocation8 + $0x8] sm:$0xff] %v698
    %744 = vst [vmem:[#allocation8 + $0x10] sm:$0xff] %v701
    %745 = vst [vmem:[#allocation8 + $0x18] sm:$0xff] %v704
    %746 = vst [vmem:[#allocation8 + $0x20] sm:$0xff] %v707
    %747 = vst [vmem:[#allocation8 + $0x28] sm:$0xff] %v710
    %748 = vst [vmem:[#allocation8 + $0x30] sm:$0xff] %v713
    %749 = vst [vmem:[#allocation8 + $0x38] sm:$0xff] %v716
    %750 = vst [vmem:[#allocation8 + $0x40] sm:$0xff] %v719
    %751 = vst [vmem:[#allocation8 + $0x48] sm:$0xff] %v722
    %752 = vst [vmem:[#allocation8 + $0x50] sm:$0xff] %v725
    %753 = vst [vmem:[#allocation8 + $0x58] sm:$0xff] %v728
    %754 = vst [vmem:[#allocation8 + $0x60] sm:$0xff] %v731
    %755 = vst [vmem:[#allocation8 + $0x68] sm:$0xff] %v734
    %756 = vst [vmem:[#allocation8 + $0x70] sm:$0xff] %v737
    %757 = vst [vmem:[#allocation8 + $0x78] sm:$0xff] %v740
    %v758 = vmax.f32 %v695, 1e-05
    %v759 = vmax.f32 %v698, 1e-05
    %v760 = vmax.f32 %v701, 1e-05
    %v761 = vmax.f32 %v704, 1e-05
    %v762 = vmax.f32 %v707, 1e-05
    %v763 = vmax.f32 %v710, 1e-05
    %v764 = vmax.f32 %v713, 1e-05
    %v765 = vmax.f32 %v716, 1e-05
    %v766 = vmax.f32 %v719, 1e-05
    %v767 = vmax.f32 %v722, 1e-05
    %v768 = vmax.f32 %v725, 1e-05
    %v769 = vmax.f32 %v728, 1e-05
    %v770 = vmax.f32 %v731, 1e-05
    %v771 = vmax.f32 %v734, 1e-05
    %v772 = vmax.f32 %v737, 1e-05
    %v773 = vmax.f32 %v740, 1e-05
    %v774 = vlog2.pop %v758
    %v775 = vmul.f32 %v774, 0.6931472
    %v776 = vlog2.pop %v759
    %v777 = vmul.f32 %v776, 0.6931472
    %v778 = vlog2.pop %v760
    %v779 = vmul.f32 %v778, 0.6931472
    %v780 = vlog2.pop %v761
    %v781 = vmul.f32 %v780, 0.6931472
    %v782 = vlog2.pop %v762
    %v783 = vmul.f32 %v782, 0.6931472
    %v784 = vlog2.pop %v763
    %v785 = vmul.f32 %v784, 0.6931472
    %v786 = vlog2.pop %v764
    %v787 = vmul.f32 %v786, 0.6931472
    %v788 = vlog2.pop %v765
    %v789 = vmul.f32 %v788, 0.6931472
    %v790 = vlog2.pop %v766
    %v791 = vmul.f32 %v790, 0.6931472
    %v792 = vlog2.pop %v767
    %v793 = vmul.f32 %v792, 0.6931472
    %v794 = vlog2.pop %v768
    %v795 = vmul.f32 %v794, 0.6931472
    %v796 = vlog2.pop %v769
    %v797 = vmul.f32 %v796, 0.6931472
    %v798 = vlog2.pop %v770
    %v799 = vmul.f32 %v798, 0.6931472
    %v800 = vlog2.pop %v771
    %v801 = vmul.f32 %v800, 0.6931472
    %v802 = vlog2.pop %v772
    %v803 = vmul.f32 %v802, 0.6931472
    %v804 = vlog2.pop %v773
    %v805 = vmul.f32 %v804, 0.6931472
    %v806 = vmul.f32 %v775, 0.4342945
    %v807 = vmul.f32 %v777, 0.4342945
    %v808 = vmul.f32 %v779, 0.4342945
    %v809 = vmul.f32 %v781, 0.4342945
    %v810 = vmul.f32 %v783, 0.4342945
    %v811 = vmul.f32 %v785, 0.4342945
    %v812 = vmul.f32 %v787, 0.4342945
    %v813 = vmul.f32 %v789, 0.4342945
    %v814 = vmul.f32 %v791, 0.4342945
    %v815 = vmul.f32 %v793, 0.4342945
    %v816 = vmul.f32 %v795, 0.4342945
    %v817 = vmul.f32 %v797, 0.4342945
    %v818 = vmul.f32 %v799, 0.4342945
    %v819 = vmul.f32 %v801, 0.4342945
    %v820 = vmul.f32 %v803, 0.4342945
    %v821 = vmul.f32 %v805, 0.4342945
    %v822 = vmul.f32 %v806, 20.0
    %v823 = vmul.f32 %v807, 20.0
    %v824 = vmul.f32 %v808, 20.0
    %v825 = vmul.f32 %v809, 20.0
    %v826 = vmul.f32 %v810, 20.0
    %v827 = vmul.f32 %v811, 20.0
    %v828 = vmul.f32 %v812, 20.0
    %v829 = vmul.f32 %v813, 20.0
    %v830 = vmul.f32 %v814, 20.0
    %v831 = vmul.f32 %v815, 20.0
    %v832 = vmul.f32 %v816, 20.0
    %v833 = vmul.f32 %v817, 20.0
    %v834 = vmul.f32 %v818, 20.0
    %v835 = vmul.f32 %v819, 20.0
    %v836 = vmul.f32 %v820, 20.0
    %v837 = vmul.f32 %v821, 20.0
    %v838 = vmax.f32 %v822, -50.0
    %v839 = vmax.f32 %v823, -50.0
    %v840 = vmax.f32 %v824, -50.0
    %v841 = vmax.f32 %v825, -50.0
    %v842 = vmax.f32 %v826, -50.0
    %v843 = vmax.f32 %v827, -50.0
    %v844 = vmax.f32 %v828, -50.0
    %v845 = vmax.f32 %v829, -50.0
    %v846 = vmax.f32 %v830, -50.0
    %v847 = vmax.f32 %v831, -50.0
    %v848 = vmax.f32 %v832, -50.0
    %v849 = vmax.f32 %v833, -50.0
    %v850 = vmax.f32 %v834, -50.0
    %v851 = vmax.f32 %v835, -50.0
    %v852 = vmax.f32 %v836, -50.0
    %v853 = vmax.f32 %v837, -50.0
    %v854 = vmin.f32 %v838, 80.0
    %v855 = vmin.f32 %v839, 80.0
    %v856 = vmin.f32 %v840, 80.0
    %v857 = vmin.f32 %v841, 80.0
    %v858 = vmin.f32 %v842, 80.0
    %v859 = vmin.f32 %v843, 80.0
    %v860 = vmin.f32 %v844, 80.0
    %v861 = vmin.f32 %v845, 80.0
    %v862 = vmin.f32 %v846, 80.0
    %v863 = vmin.f32 %v847, 80.0
    %v864 = vmin.f32 %v848, 80.0
    %v865 = vmin.f32 %v849, 80.0
    %v866 = vmin.f32 %v850, 80.0
    %v867 = vmin.f32 %v851, 80.0
    %v868 = vmin.f32 %v852, 80.0
    %v869 = vmin.f32 %v853, 80.0
    %870 = vst [vmem:[#allocation9] sm:$0xff] %v854
    %871 = vst [vmem:[#allocation9 + $0x8] sm:$0xff] %v855
    %872 = vst [vmem:[#allocation9 + $0x10] sm:$0xff] %v856
    %873 = vst [vmem:[#allocation9 + $0x18] sm:$0xff] %v857
    %874 = vst [vmem:[#allocation9 + $0x20] sm:$0xff] %v858
    %875 = vst [vmem:[#allocation9 + $0x28] sm:$0xff] %v859
    %876 = vst [vmem:[#allocation9 + $0x30] sm:$0xff] %v860
    %877 = vst [vmem:[#allocation9 + $0x38] sm:$0xff] %v861
    %878 = vst [vmem:[#allocation9 + $0x40] sm:$0xff] %v862
    %879 = vst [vmem:[#allocation9 + $0x48] sm:$0xff] %v863
    %880 = vst [vmem:[#allocation9 + $0x50] sm:$0xff] %v864
    %881 = vst [vmem:[#allocation9 + $0x58] sm:$0xff] %v865
    %882 = vst [vmem:[#allocation9 + $0x60] sm:$0xff] %v866
    %883 = vst [vmem:[#allocation9 + $0x68] sm:$0xff] %v867
    %884 = vst [vmem:[#allocation9 + $0x70] sm:$0xff] %v868
    %885 = vst [vmem:[#allocation9 + $0x78] sm:$0xff] %v869
    // Predicated region
    $region26: #{tpu_custom_call.1} parent=1 // pred_check
      _
    $region27: #{tpu_custom_call.1} parent=1 // pred_check_branch
      %887 = sbr.rel (0) target = $region29
    $region28: #{tpu_custom_call.1} parent=1 // pred_region
      %889 = vsyncadd [#allocation4], 0
      %s890 = sshll.u32 [#allocation8], 4
      %s891 = int_to_ptr.vmem [resolvable:$true] %s890
      %s892 = sshll.u32 %s3, 4
      %s893 = int_to_ptr.hbm [resolvable:$true] %s892
      %898 = dma.vmem_to_hbm [thread:$0]  %s891, 2048, %s893, [#allocation4], 128, 128, 8
    $region29: #{tpu_custom_call.1} parent=1 // pred_fallthru
      _
    // Predicated region
    $region30: #{tpu_custom_call.1} parent=1 // pred_check
      _
    $region31: #{tpu_custom_call.1} parent=1 // pred_check_branch
      %900 = sbr.rel (0) target = $region33
    $region32: #{tpu_custom_call.1} parent=1 // pred_region
      %902 = vsyncadd [#allocation10], 0
      %s903 = sshll.u32 [#allocation9], 4
      %s904 = int_to_ptr.vmem [resolvable:$true] %s903
      %s905 = sshll.u32 %s4, 4
      %s906 = int_to_ptr.hbm [resolvable:$true] %s905
      %911 = dma.vmem_to_hbm [thread:$0]  %s904, 2048, %s906, [#allocation10], 128, 128, 8
    $region33: #{tpu_custom_call.1} parent=1 // pred_fallthru
      _
    // Predicated region
    $region34: #{tpu_custom_call.1} parent=1 // pred_check
      _
    $region35: #{tpu_custom_call.1} parent=1 // pred_check_branch
      %913 = sbr.rel (0) target = $region37
    $region36: #{tpu_custom_call.1} parent=1 // pred_region
      %915 = dma.done [#allocation4], 2048
    $region37: #{tpu_custom_call.1} parent=1 // pred_fallthru
      _
    // Predicated region
    $region38: #{tpu_custom_call.1} parent=1 // pred_check
      _
    $region39: #{tpu_custom_call.1} parent=1 // pred_check_branch
      %917 = sbr.rel (0) target = $region41
    $region40: #{tpu_custom_call.1} parent=1 // pred_region
      %919 = dma.done [#allocation10], 2048
    $region41: #{tpu_custom_call.1} parent=1 // pred_fallthru
      _
    %920 = vsyncpa [#allocation3], 1
    %921 = vsyncpa [#allocation6], 1
    %922 = vsyncpa [#allocation4], 1
    %923 = vsyncpa [#allocation10], 1

</llo_original>
